<compile_context>
chip_gen: v7x
topology: tpu7x:2x2x1
jax: 0.10.0
libtpu: 0.0.40
codegen_flags: <defaults>
</compile_context>

<pallas_src>
import functools

import jax
import jax.numpy as jnp
from jax.experimental import pallas as pl
from jax.experimental.pallas import tpu as pltpu


def _gelu_erf(x):
    # erf via Abramowitz & Stegun 7.1.26 -- matches torch.nn.GELU() (erf form).
    # exp + approximate reciprocal go to the EUP slot (off the VALU path).
    p = 0.3275911
    a1, a2, a3, a4, a5 = (0.254829592, -0.284496736, 1.421413741,
                          -1.453152027, 1.061405429)
    u = x * 0.7071067811865476
    sign = jnp.where(u >= 0.0, 1.0, -1.0)
    au = jnp.abs(u)
    t = pl.reciprocal(1.0 + p * au, approx=True)
    poly = ((((a5 * t + a4) * t + a3) * t + a2) * t + a1) * t
    erf = sign * (1.0 - poly * jnp.exp(-au * au))
    return 0.5 * x * (1.0 + erf)


def _conv_encoder_kernel(x_ref, msk_ref, dww_ref, dwb_ref, w1_ref, b1_ref,
                         w2_ref, b2_ref, o_ref, y_ref, *, W, hw_tile):
    # x_ref: (C, HW) full image for this batch element (resident across tiles)
    # msk_ref: (9, HW) precomputed border masks (1.0 valid / 0.0 out of image)
    # y_ref:  (C, HW) VMEM scratch holding the folded dwconv+BN result
    # o_ref:  (C, hw_tile) output tile
    t = pl.program_id(1)

    # ---- depthwise 3x3 (BatchNorm folded), computed once per batch element --
    @pl.when(t == 0)
    def _():
        xf = x_ref[...]                                   # (C, HW) f32
        HW = xf.shape[1]
        dww = dww_ref[...]                                # (C, 9) folded weights
        msk = msk_ref[...]                                # (9, HW) f32 masks
        y = xf * dww[:, 4:5]                              # center tap (no roll/mask)
        for kh in range(3):
            for kw in range(3):
                dh, dw = kh - 1, kw - 1
                s = dh * W + dw
                if s == 0:
                    continue
                k = kh * 3 + kw
                # tap[i] = x[i + s]; mask kills roll wrap-around == zero padding
                tap = pltpu.roll(xf, shift=(-s) % HW, axis=1)
                y = y + (tap * msk[k:k + 1, :]) * dww[:, k:k + 1]
        y_ref[...] = y + dwb_ref[...]                      # (C, 1) folded bias

    # ---- per-tile pointwise convs on the MXU (bf16 in, f32 accumulation) ----
    start = t * hw_tile
    if hw_tile % 128 == 0:
        start = pl.multiple_of(start, 128)
    y_t = y_ref[:, pl.ds(start, hw_tile)]                  # (C, tile) f32
    x_t = x_ref[:, pl.ds(start, hw_tile)]                  # (C, tile) f32

    h = jnp.dot(w1_ref[...], y_t.astype(jnp.bfloat16),
                preferred_element_type=jnp.float32)        # (hidden, tile) f32
    h = h + b1_ref[...]
    h = _gelu_erf(h)
    z = jnp.dot(w2_ref[...], h.astype(jnp.bfloat16),
                preferred_element_type=jnp.float32)        # (C, tile) f32
    z = z + b2_ref[...]

    # ---- residual (drop_path = 0.0 -> Identity), layer_scale already folded --
    o_ref[...] = x_t + z


def _pick_hw_tile(HW, hidden, budget_bytes=16 << 20):
    """Largest lane-aligned divisor of HW whose (hidden, tile) intermediates
    fit the budget; falls back to the full HW (always legal as a block)."""
    cands = [d for d in range(128, HW + 1, 128) if HW % d == 0]
    if not cands:
        return HW
    ok = [d for d in cands if hidden * d * 6 <= budget_bytes]   # f32 h + bf16 h
    return max(ok) if ok else min(cands)


def _vmem_bytes_estimate(C, HW, hidden, hw_tile):
    f32, bf16 = 4, 2
    weights = 2 * ((hidden * C + C * hidden) * bf16          # w1, w2 (bf16)
                   + (C * 9 + C + hidden + C) * f32          # dww, dwb, b1, b2
                   + 9 * HW * f32)                           # masks
    acts = 2 * C * HW * f32                                  # x double buffer
    acts += C * HW * f32                                     # dwconv scratch
    acts += 2 * C * hw_tile * f32                            # out double buffer
    interm = hidden * hw_tile * (f32 + bf16)                 # h (f32) + bf16 copy
    interm += 4 * C * HW * f32                               # dwconv temporaries
    return weights + acts + interm


def conv_encoder(x, params, hw_tile=None):
    """x: (B, C, H, W) float32 NCHW (same layout as the PyTorch module)."""
    B, C, H, W = x.shape
    HW = H * W
    hidden = params["w1"].shape[0]
    eps = 1e-5

    # --- constant folding (done once, outside the kernel) --------------------
    # BatchNorm2d folded into the depthwise conv (inference / running stats).
    # TODO(synk): training-mode BatchNorm (batch statistics) not implemented.
    inv_std = params["bn_gamma"] / jnp.sqrt(params["bn_var"] + eps)
    bn_shift = params["bn_beta"] - params["bn_mean"] * inv_std
    dw_w = (params["dw_w"] * inv_std[:, None, None]).reshape(C, 9)
    dw_b = (params["dw_b"] * inv_std + bn_shift)[:, None]
    # layer_scale folded into pwconv2; weights pre-cast to bf16 (once, here).
    ls = params["layer_scale"]
    w1 = params["w1"].astype(jnp.bfloat16)
    b1 = params["b1"][:, None]
    w2 = (params["w2"] * ls[:, None]).astype(jnp.bfloat16)
    b2 = (params["b2"] * ls)[:, None]

    # Precomputed border masks for the 9 depthwise taps (batch-invariant).
    rows = jnp.arange(HW, dtype=jnp.int32) // W
    cols = jnp.arange(HW, dtype=jnp.int32) % W
    tap_masks = []
    for kh in range(3):
        for kw in range(3):
            dh, dw = kh - 1, kw - 1
            m = ((rows + dh >= 0) & (rows + dh <= H - 1)
                 & (cols + dw >= 0) & (cols + dw <= W - 1))
            tap_masks.append(m.astype(jnp.float32))
    masks = jnp.stack(tap_masks)                       # (9, HW)

    xf = x.reshape(B, C, HW)                           # metadata-only reshape

    if hw_tile is None:
        hw_tile = _pick_hw_tile(HW, hidden)
    assert HW % hw_tile == 0 and (hw_tile % 128 == 0 or hw_tile == HW)
    n_tiles = HW // hw_tile

    # NOTE: C / hidden are left unpadded here (toy sizes); for production,
    # pad both to MXU-native multiples (128 / 256) so the dots hit the MXU
    # roofline instead of being K-starved.
    kernel = functools.partial(_conv_encoder_kernel, W=W, hw_tile=hw_tile)

    def bcast(shape):
        nd = len(shape)
        return pl.BlockSpec(shape, lambda b, t, _nd=nd: (0,) * _nd)

    vmem_limit = max(32 << 20,
                     min(2 * _vmem_bytes_estimate(C, HW, hidden, hw_tile),
                         48 << 20))

    out = pl.pallas_call(
        kernel,
        out_shape=jax.ShapeDtypeStruct((B, C, HW), jnp.float32),
        grid=(B, n_tiles),
        in_specs=[
            pl.BlockSpec((None, C, HW), lambda b, t: (b, 0, 0)),  # x (resident)
            bcast((9, HW)),          # precomputed border masks
            bcast((C, 9)),           # depthwise weight (BN folded)
            bcast((C, 1)),           # depthwise bias   (BN folded)
            bcast((hidden, C)),      # pwconv1 weight (bf16)
            bcast((hidden, 1)),      # pwconv1 bias
            bcast((C, hidden)),      # pwconv2 weight (bf16, layer_scale folded)
            bcast((C, 1)),           # pwconv2 bias   (layer_scale folded)
        ],
        out_specs=pl.BlockSpec((None, C, hw_tile), lambda b, t: (b, 0, t)),
        scratch_shapes=[pltpu.VMEM((C, HW), jnp.float32)],   # dwconv result
        compiler_params=pltpu.CompilerParams(
            # HW-tile axis carries the dwconv scratch -> "arbitrary";
            # batch axis shards across v7x TensorCores.
            dimension_semantics=("parallel", "arbitrary"),
            vmem_limit_bytes=int(vmem_limit)),
    )(xf, masks, dw_w, dw_b, w1, b1, w2, b2)

    return out.reshape(B, C, H, W)


def init_params(key, dim, hidden_dim):
    """Synthetic weights matching the torch module's __init__."""
    k1, k2, k3 = jax.random.split(key, 3)

    def trunc_normal(k, shape, std=0.02):
        return std * jax.random.truncated_normal(k, -2.0, 2.0, shape, jnp.float32)

    return dict(
        dw_w=trunc_normal(k1, (dim, 3, 3)),        # Conv2d(dim,dim,3,groups=dim)
        dw_b=jnp.zeros((dim,), jnp.float32),
        bn_gamma=jnp.ones((dim,), jnp.float32),    # BatchNorm2d defaults
        bn_beta=jnp.zeros((dim,), jnp.float32),
        bn_mean=jnp.zeros((dim,), jnp.float32),
        bn_var=jnp.ones((dim,), jnp.float32),
        w1=trunc_normal(k2, (hidden_dim, dim)),    # Conv2d(dim,hidden,1)
        b1=jnp.zeros((hidden_dim,), jnp.float32),
        w2=trunc_normal(k3, (dim, hidden_dim)),    # Conv2d(hidden,dim,1)
        b2=jnp.zeros((dim,), jnp.float32),
        layer_scale=jnp.ones((dim,), jnp.float32),
    )


def conv_encoder_ref(x, p):
    """Pure-JAX f32 reference mirroring the torch forward (eval-mode BN)."""
    C = x.shape[1]
    y = jax.lax.conv_general_dilated(
        x, p["dw_w"][:, None, :, :], window_strides=(1, 1),
        padding=((1, 1), (1, 1)),
        dimension_numbers=("NCHW", "OIHW", "NCHW"),
        feature_group_count=C)
    y = y + p["dw_b"][None, :, None, None]
    inv_std = p["bn_gamma"] / jnp.sqrt(p["bn_var"] + 1e-5)
    y = (y - p["bn_mean"][None, :, None, None]) * inv_std[None, :, None, None] \
        + p["bn_beta"][None, :, None, None]
    h = jnp.einsum("oc,bchw->bohw", p["w1"], y) + p["b1"][None, :, None, None]
    h = jax.nn.gelu(h, approximate=False)
    z = jnp.einsum("co,bohw->bchw", p["w2"], h) + p["b2"][None, :, None, None]
    return x + p["layer_scale"][None, :, None, None] * z


if __name__ == "__main__":
    key = jax.random.PRNGKey(0)
    kx, kp = jax.random.split(key)

    B, dim, H, W = 2, 4, 16, 16
    hidden_dim = 32

    x = jax.random.normal(kx, (B, dim, H, W), jnp.float32)
    params = init_params(kp, dim, hidden_dim)
    ref = conv_encoder_ref(x, params)

    # Default tile choice (single 256-lane tile at this toy size).
    out = conv_encoder(x, params)
    jax.block_until_ready(out)
    assert out.shape == (B, dim, H, W) and out.dtype == jnp.float32
    err = float(jnp.max(jnp.abs(out - ref)))
    assert err < 5e-3, f"max abs error (untiled) {err}"

    # Forced HW tiling (128 lanes -> 2 spatial tiles) to exercise the
    # production tiling path.
    out_tiled = conv_encoder(x, params, hw_tile=128)
    jax.block_until_ready(out_tiled)
    err_t = float(jnp.max(jnp.abs(out_tiled - ref)))
    assert err_t < 5e-3, f"max abs error (tiled) {err_t}"

    print("KERNEL_OK")
</pallas_src>

<mosaic_0001>
module attributes {stable_mosaic.version = 11 : i64} {
  func.func @_conv_encoder_kernel(%arg0: i32, %arg1: i32, %arg2: memref<1x4x256xf32, #tpu.memory_space<vmem>>, %arg3: memref<9x256xf32, #tpu.memory_space<vmem>>, %arg4: memref<4x9xf32, #tpu.memory_space<vmem>>, %arg5: memref<4x1xf32, #tpu.memory_space<vmem>>, %arg6: memref<32x4xbf16, #tpu.memory_space<vmem>>, %arg7: memref<32x1xf32, #tpu.memory_space<vmem>>, %arg8: memref<4x32xbf16, #tpu.memory_space<vmem>>, %arg9: memref<4x1xf32, #tpu.memory_space<vmem>>, %arg10: memref<1x4x256xf32, #tpu.memory_space<vmem>>, %arg11: memref<4x256xf32, #tpu.memory_space<vmem>>) attributes {dimension_semantics = [#tpu.dimension_semantics<parallel>, #tpu.dimension_semantics<arbitrary>], iteration_bounds = array<i64: 2, 1>, scalar_prefetch = 0 : i64, scratch_operands = 1 : i64, tpu.core_type = #tpu.core_type<tc>, window_params = [{transform_indices = @transform_0, window_bounds = array<i64: 1, 4, 256>}, {pipeline_mode = #tpu.pipeline_mode<synchronous>, transform_indices = @transform_1, window_bounds = array<i64: 9, 256>}, {pipeline_mode = #tpu.pipeline_mode<synchronous>, transform_indices = @transform_2, window_bounds = array<i64: 4, 9>}, {pipeline_mode = #tpu.pipeline_mode<synchronous>, transform_indices = @transform_3, window_bounds = array<i64: 4, 1>}, {pipeline_mode = #tpu.pipeline_mode<synchronous>, transform_indices = @transform_4, window_bounds = array<i64: 32, 4>}, {pipeline_mode = #tpu.pipeline_mode<synchronous>, transform_indices = @transform_5, window_bounds = array<i64: 32, 1>}, {pipeline_mode = #tpu.pipeline_mode<synchronous>, transform_indices = @transform_6, window_bounds = array<i64: 4, 32>}, {pipeline_mode = #tpu.pipeline_mode<synchronous>, transform_indices = @transform_7, window_bounds = array<i64: 4, 1>}, {transform_indices = @transform_8, window_bounds = array<i64: 1, 4, 256>}]} {
    %c0_i32 = arith.constant 0 : i32
    %0 = arith.cmpi eq, %arg1, %c0_i32 : i32
    %1 = arith.extui %0 : i1 to i32
    %c0_i32_0 = arith.constant 0 : i32
    %2 = arith.cmpi ne, %1, %c0_i32_0 : i32
    scf.if %2 {
      %c0_30 = arith.constant 0 : index
      %c0_31 = arith.constant 0 : index
      %c0_32 = arith.constant 0 : index
      %66 = vector.load %arg2[%c0_30, %c0_31, %c0_32] : memref<1x4x256xf32, #tpu.memory_space<vmem>>, vector<1x4x256xf32>
      %67 = vector.shape_cast %66 : vector<1x4x256xf32> to vector<4x256xf32>
      %c0_33 = arith.constant 0 : index
      %c0_34 = arith.constant 0 : index
      %68 = vector.load %arg4[%c0_33, %c0_34] : memref<4x9xf32, #tpu.memory_space<vmem>>, vector<4x9xf32>
      %c0_35 = arith.constant 0 : index
      %c0_36 = arith.constant 0 : index
      %69 = vector.load %arg3[%c0_35, %c0_36] : memref<9x256xf32, #tpu.memory_space<vmem>>, vector<9x256xf32>
      %70 = vector.extract_strided_slice %68 {offsets = [0, 4], sizes = [4, 1], strides = [1, 1]} : vector<4x9xf32> to vector<4x1xf32>
      %71 = vector.broadcast %70 : vector<4x1xf32> to vector<4x256xf32>
      %72 = arith.mulf %67, %71 : vector<4x256xf32>
      %c17_i32 = arith.constant 17 : i32
      %73 = tpu.dynamic_rotate %67 by %c17_i32 dim 1 : vector<4x256xf32>, i32 -> vector<4x256xf32>
      %74 = vector.extract_strided_slice %69 {offsets = [0, 0], sizes = [1, 256], strides = [1, 1]} : vector<9x256xf32> to vector<1x256xf32>
      %75 = vector.broadcast %74 : vector<1x256xf32> to vector<4x256xf32>
      %76 = arith.mulf %73, %75 : vector<4x256xf32>
      %77 = vector.extract_strided_slice %68 {offsets = [0, 0], sizes = [4, 1], strides = [1, 1]} : vector<4x9xf32> to vector<4x1xf32>
      %78 = vector.broadcast %77 : vector<4x1xf32> to vector<4x256xf32>
      %79 = arith.mulf %76, %78 : vector<4x256xf32>
      %80 = arith.addf %72, %79 : vector<4x256xf32>
      %c16_i32 = arith.constant 16 : i32
      %81 = tpu.dynamic_rotate %67 by %c16_i32 dim 1 : vector<4x256xf32>, i32 -> vector<4x256xf32>
      %82 = vector.extract_strided_slice %69 {offsets = [1, 0], sizes = [1, 256], strides = [1, 1]} : vector<9x256xf32> to vector<1x256xf32>
      %83 = vector.broadcast %82 : vector<1x256xf32> to vector<4x256xf32>
      %84 = arith.mulf %81, %83 : vector<4x256xf32>
      %85 = vector.extract_strided_slice %68 {offsets = [0, 1], sizes = [4, 1], strides = [1, 1]} : vector<4x9xf32> to vector<4x1xf32>
      %86 = vector.broadcast %85 : vector<4x1xf32> to vector<4x256xf32>
      %87 = arith.mulf %84, %86 : vector<4x256xf32>
      %88 = arith.addf %80, %87 : vector<4x256xf32>
      %c15_i32 = arith.constant 15 : i32
      %89 = tpu.dynamic_rotate %67 by %c15_i32 dim 1 : vector<4x256xf32>, i32 -> vector<4x256xf32>
      %90 = vector.extract_strided_slice %69 {offsets = [2, 0], sizes = [1, 256], strides = [1, 1]} : vector<9x256xf32> to vector<1x256xf32>
      %91 = vector.broadcast %90 : vector<1x256xf32> to vector<4x256xf32>
      %92 = arith.mulf %89, %91 : vector<4x256xf32>
      %93 = vector.extract_strided_slice %68 {offsets = [0, 2], sizes = [4, 1], strides = [1, 1]} : vector<4x9xf32> to vector<4x1xf32>
      %94 = vector.broadcast %93 : vector<4x1xf32> to vector<4x256xf32>
      %95 = arith.mulf %92, %94 : vector<4x256xf32>
      %96 = arith.addf %88, %95 : vector<4x256xf32>
      %c1_i32 = arith.constant 1 : i32
      %97 = tpu.dynamic_rotate %67 by %c1_i32 dim 1 : vector<4x256xf32>, i32 -> vector<4x256xf32>
      %98 = vector.extract_strided_slice %69 {offsets = [3, 0], sizes = [1, 256], strides = [1, 1]} : vector<9x256xf32> to vector<1x256xf32>
      %99 = vector.broadcast %98 : vector<1x256xf32> to vector<4x256xf32>
      %100 = arith.mulf %97, %99 : vector<4x256xf32>
      %101 = vector.extract_strided_slice %68 {offsets = [0, 3], sizes = [4, 1], strides = [1, 1]} : vector<4x9xf32> to vector<4x1xf32>
      %102 = vector.broadcast %101 : vector<4x1xf32> to vector<4x256xf32>
      %103 = arith.mulf %100, %102 : vector<4x256xf32>
      %104 = arith.addf %96, %103 : vector<4x256xf32>
      %c255_i32 = arith.constant 255 : i32
      %105 = tpu.dynamic_rotate %67 by %c255_i32 dim 1 : vector<4x256xf32>, i32 -> vector<4x256xf32>
      %106 = vector.extract_strided_slice %69 {offsets = [5, 0], sizes = [1, 256], strides = [1, 1]} : vector<9x256xf32> to vector<1x256xf32>
      %107 = vector.broadcast %106 : vector<1x256xf32> to vector<4x256xf32>
      %108 = arith.mulf %105, %107 : vector<4x256xf32>
      %109 = vector.extract_strided_slice %68 {offsets = [0, 5], sizes = [4, 1], strides = [1, 1]} : vector<4x9xf32> to vector<4x1xf32>
      %110 = vector.broadcast %109 : vector<4x1xf32> to vector<4x256xf32>
      %111 = arith.mulf %108, %110 : vector<4x256xf32>
      %112 = arith.addf %104, %111 : vector<4x256xf32>
      %c241_i32 = arith.constant 241 : i32
      %113 = tpu.dynamic_rotate %67 by %c241_i32 dim 1 : vector<4x256xf32>, i32 -> vector<4x256xf32>
      %114 = vector.extract_strided_slice %69 {offsets = [6, 0], sizes = [1, 256], strides = [1, 1]} : vector<9x256xf32> to vector<1x256xf32>
      %115 = vector.broadcast %114 : vector<1x256xf32> to vector<4x256xf32>
      %116 = arith.mulf %113, %115 : vector<4x256xf32>
      %117 = vector.extract_strided_slice %68 {offsets = [0, 6], sizes = [4, 1], strides = [1, 1]} : vector<4x9xf32> to vector<4x1xf32>
      %118 = vector.broadcast %117 : vector<4x1xf32> to vector<4x256xf32>
      %119 = arith.mulf %116, %118 : vector<4x256xf32>
      %120 = arith.addf %112, %119 : vector<4x256xf32>
      %c240_i32 = arith.constant 240 : i32
      %121 = tpu.dynamic_rotate %67 by %c240_i32 dim 1 : vector<4x256xf32>, i32 -> vector<4x256xf32>
      %122 = vector.extract_strided_slice %69 {offsets = [7, 0], sizes = [1, 256], strides = [1, 1]} : vector<9x256xf32> to vector<1x256xf32>
      %123 = vector.broadcast %122 : vector<1x256xf32> to vector<4x256xf32>
      %124 = arith.mulf %121, %123 : vector<4x256xf32>
      %125 = vector.extract_strided_slice %68 {offsets = [0, 7], sizes = [4, 1], strides = [1, 1]} : vector<4x9xf32> to vector<4x1xf32>
      %126 = vector.broadcast %125 : vector<4x1xf32> to vector<4x256xf32>
      %127 = arith.mulf %124, %126 : vector<4x256xf32>
      %128 = arith.addf %120, %127 : vector<4x256xf32>
      %c239_i32 = arith.constant 239 : i32
      %129 = tpu.dynamic_rotate %67 by %c239_i32 dim 1 : vector<4x256xf32>, i32 -> vector<4x256xf32>
      %130 = vector.extract_strided_slice %69 {offsets = [8, 0], sizes = [1, 256], strides = [1, 1]} : vector<9x256xf32> to vector<1x256xf32>
      %131 = vector.broadcast %130 : vector<1x256xf32> to vector<4x256xf32>
      %132 = arith.mulf %129, %131 : vector<4x256xf32>
      %133 = vector.extract_strided_slice %68 {offsets = [0, 8], sizes = [4, 1], strides = [1, 1]} : vector<4x9xf32> to vector<4x1xf32>
      %134 = vector.broadcast %133 : vector<4x1xf32> to vector<4x256xf32>
      %135 = arith.mulf %132, %134 : vector<4x256xf32>
      %136 = arith.addf %128, %135 : vector<4x256xf32>
      %c0_37 = arith.constant 0 : index
      %c0_38 = arith.constant 0 : index
      %137 = vector.load %arg5[%c0_37, %c0_38] : memref<4x1xf32, #tpu.memory_space<vmem>>, vector<4x1xf32>
      %138 = vector.broadcast %137 : vector<4x1xf32> to vector<4x256xf32>
      %139 = arith.addf %136, %138 : vector<4x256xf32>
      %c0_39 = arith.constant 0 : index
      %c0_40 = arith.constant 0 : index
      %140 = vector.load %arg11[%c0_39, %c0_40] : memref<4x256xf32, #tpu.memory_space<vmem>>, vector<4x256xf32>
      tpu.vector_store %arg11[%c0_39, %c0_40], %139 {strides = array<i32>} : memref<4x256xf32, #tpu.memory_space<vmem>>, vector<4x256xf32>,
    } else {
    }
    %c256_i32 = arith.constant 256 : i32
    %3 = arith.muli %arg1, %c256_i32 : i32
    %4 = tpu.assume_multiple %3, 128 : i32
    %c0 = arith.constant 0 : index
    %5 = arith.index_cast %4 : i32 to index
    %6 = vector.load %arg11[%c0, %5] : memref<4x256xf32, #tpu.memory_space<vmem>>, vector<4x256xf32>
    %c0_1 = arith.constant 0 : index
    %c0_2 = arith.constant 0 : index
    %7 = arith.index_cast %4 : i32 to index
    %8 = vector.load %arg2[%c0_1, %c0_2, %7] : memref<1x4x256xf32, #tpu.memory_space<vmem>>, vector<1x4x256xf32>
    %9 = vector.shape_cast %8 : vector<1x4x256xf32> to vector<4x256xf32>
    %c0_3 = arith.constant 0 : index
    %c0_4 = arith.constant 0 : index
    %10 = vector.load %arg6[%c0_3, %c0_4] : memref<32x4xbf16, #tpu.memory_space<vmem>>, vector<32x4xbf16>
    %11 = arith.truncf %6 : vector<4x256xf32> to vector<4x256xbf16>
    %cst = arith.constant dense<0.000000e+00> : vector<32x256xf32>
    %12 = tpu.matmul %10, %11, %cst {dimension_numbers = #tpu.dot_dimension_numbers<[1], [0], [0], [1], [0, 0, 1, 1], [], []>} : vector<32x4xbf16>, vector<4x256xbf16>, vector<32x256xf32> -> vector<32x256xf32>
    %c0_5 = arith.constant 0 : index
    %c0_6 = arith.constant 0 : index
    %13 = vector.load %arg7[%c0_5, %c0_6] : memref<32x1xf32, #tpu.memory_space<vmem>>, vector<32x1xf32>
    %14 = vector.broadcast %13 : vector<32x1xf32> to vector<32x256xf32>
    %15 = arith.addf %12, %14 : vector<32x256xf32>
    %cst_7 = arith.constant 0.707106769 : f32
    %16 = vector.broadcast %cst_7 : f32 to vector<32x256xf32>
    %17 = arith.mulf %15, %16 : vector<32x256xf32>
    %cst_8 = arith.constant 0.000000e+00 : f32
    %18 = vector.broadcast %cst_8 : f32 to vector<32x256xf32>
    %19 = arith.cmpf oge, %17, %18 : vector<32x256xf32>
    %cst_9 = arith.constant 1.000000e+00 : f32
    %cst_10 = arith.constant -1.000000e+00 : f32
    %20 = vector.broadcast %cst_9 : f32 to vector<32x256xf32>
    %21 = vector.broadcast %cst_10 : f32 to vector<32x256xf32>
    %22 = arith.select %19, %20, %21 : vector<32x256xi1>, vector<32x256xf32>
    %23 = math.absf %17 : vector<32x256xf32>
    %cst_11 = arith.constant 0.327591091 : f32
    %24 = vector.broadcast %cst_11 : f32 to vector<32x256xf32>
    %25 = arith.mulf %24, %23 : vector<32x256xf32>
    %cst_12 = arith.constant 1.000000e+00 : f32
    %26 = vector.broadcast %cst_12 : f32 to vector<32x256xf32>
    %27 = arith.addf %26, %25 : vector<32x256xf32>
    %28 = tpu.reciprocal %27 {approx = true} : vector<32x256xf32> -> vector<32x256xf32>
    %cst_13 = arith.constant 1.06140542 : f32
    %29 = vector.broadcast %cst_13 : f32 to vector<32x256xf32>
    %30 = arith.mulf %29, %28 : vector<32x256xf32>
    %cst_14 = arith.constant -1.45315206 : f32
    %31 = vector.broadcast %cst_14 : f32 to vector<32x256xf32>
    %32 = arith.addf %30, %31 : vector<32x256xf32>
    %33 = arith.mulf %32, %28 : vector<32x256xf32>
    %cst_15 = arith.constant 1.42141378 : f32
    %34 = vector.broadcast %cst_15 : f32 to vector<32x256xf32>
    %35 = arith.addf %33, %34 : vector<32x256xf32>
    %36 = arith.mulf %35, %28 : vector<32x256xf32>
    %cst_16 = arith.constant -0.284496725 : f32
    %37 = vector.broadcast %cst_16 : f32 to vector<32x256xf32>
    %38 = arith.addf %36, %37 : vector<32x256xf32>
    %39 = arith.mulf %38, %28 : vector<32x256xf32>
    %cst_17 = arith.constant 0.254829586 : f32
    %40 = vector.broadcast %cst_17 : f32 to vector<32x256xf32>
    %41 = arith.addf %39, %40 : vector<32x256xf32>
    %42 = arith.mulf %41, %28 : vector<32x256xf32>
    %cst_18 = arith.constant 0.000000e+00 : f32
    %43 = vector.broadcast %cst_18 : f32 to vector<32x256xf32>
    %44 = arith.subf %43, %23 : vector<32x256xf32>
    %45 = arith.mulf %44, %23 : vector<32x256xf32>
    %46 = math.exp %45 : vector<32x256xf32>
    %47 = arith.mulf %42, %46 : vector<32x256xf32>
    %cst_19 = arith.constant 1.000000e+00 : f32
    %48 = vector.broadcast %cst_19 : f32 to vector<32x256xf32>
    %49 = arith.subf %48, %47 : vector<32x256xf32>
    %50 = arith.mulf %22, %49 : vector<32x256xf32>
    %cst_20 = arith.constant 5.000000e-01 : f32
    %51 = vector.broadcast %cst_20 : f32 to vector<32x256xf32>
    %52 = arith.mulf %51, %15 : vector<32x256xf32>
    %cst_21 = arith.constant 1.000000e+00 : f32
    %53 = vector.broadcast %cst_21 : f32 to vector<32x256xf32>
    %54 = arith.addf %53, %50 : vector<32x256xf32>
    %55 = arith.mulf %52, %54 : vector<32x256xf32>
    %c0_22 = arith.constant 0 : index
    %c0_23 = arith.constant 0 : index
    %56 = vector.load %arg8[%c0_22, %c0_23] : memref<4x32xbf16, #tpu.memory_space<vmem>>, vector<4x32xbf16>
    %57 = arith.truncf %55 : vector<32x256xf32> to vector<32x256xbf16>
    %cst_24 = arith.constant dense<0.000000e+00> : vector<4x256xf32>
    %58 = tpu.matmul %56, %57, %cst_24 {dimension_numbers = #tpu.dot_dimension_numbers<[1], [0], [0], [1], [0, 0, 1, 1], [], []>} : vector<4x32xbf16>, vector<32x256xbf16>, vector<4x256xf32> -> vector<4x256xf32>
    %c0_25 = arith.constant 0 : index
    %c0_26 = arith.constant 0 : index
    %59 = vector.load %arg9[%c0_25, %c0_26] : memref<4x1xf32, #tpu.memory_space<vmem>>, vector<4x1xf32>
    %60 = vector.broadcast %59 : vector<4x1xf32> to vector<4x256xf32>
    %61 = arith.addf %58, %60 : vector<4x256xf32>
    %62 = arith.addf %9, %61 : vector<4x256xf32>
    %c0_27 = arith.constant 0 : index
    %c0_28 = arith.constant 0 : index
    %c0_29 = arith.constant 0 : index
    %63 = vector.load %arg10[%c0_27, %c0_28, %c0_29] : memref<1x4x256xf32, #tpu.memory_space<vmem>>, vector<1x4x256xf32>
    %64 = vector.shape_cast %63 : vector<1x4x256xf32> to vector<4x256xf32>
    %65 = vector.shape_cast %62 : vector<4x256xf32> to vector<1x4x256xf32>
    tpu.vector_store %arg10[%c0_27, %c0_28, %c0_29], %65 {strides = array<i32>} : memref<1x4x256xf32, #tpu.memory_space<vmem>>, vector<1x4x256xf32>,
    return
  }
  func.func @transform_0(%arg0: i32, %arg1: i32) -> (i32, i32, i32) {
    %c0_i32 = arith.constant 0 : i32
    %c0_i32_0 = arith.constant 0 : i32
    %c0_i32_1 = arith.constant 0 : i32
    return %arg0, %c0_i32, %c0_i32_0 : i32, i32, i32
  }
  func.func @transform_1(%arg0: i32, %arg1: i32) -> (i32, i32) {
    %c0_i32 = arith.constant 0 : i32
    %c0_i32_0 = arith.constant 0 : i32
    %c0_i32_1 = arith.constant 0 : i32
    return %c0_i32, %c0_i32_0 : i32, i32
  }
  func.func @transform_2(%arg0: i32, %arg1: i32) -> (i32, i32) {
    %c0_i32 = arith.constant 0 : i32
    %c0_i32_0 = arith.constant 0 : i32
    %c0_i32_1 = arith.constant 0 : i32
    return %c0_i32, %c0_i32_0 : i32, i32
  }
  func.func @transform_3(%arg0: i32, %arg1: i32) -> (i32, i32) {
    %c0_i32 = arith.constant 0 : i32
    %c0_i32_0 = arith.constant 0 : i32
    %c0_i32_1 = arith.constant 0 : i32
    return %c0_i32, %c0_i32_0 : i32, i32
  }
  func.func @transform_4(%arg0: i32, %arg1: i32) -> (i32, i32) {
    %c0_i32 = arith.constant 0 : i32
    %c0_i32_0 = arith.constant 0 : i32
    %c0_i32_1 = arith.constant 0 : i32
    return %c0_i32, %c0_i32_0 : i32, i32
  }
  func.func @transform_5(%arg0: i32, %arg1: i32) -> (i32, i32) {
    %c0_i32 = arith.constant 0 : i32
    %c0_i32_0 = arith.constant 0 : i32
    %c0_i32_1 = arith.constant 0 : i32
    return %c0_i32, %c0_i32_0 : i32, i32
  }
  func.func @transform_6(%arg0: i32, %arg1: i32) -> (i32, i32) {
    %c0_i32 = arith.constant 0 : i32
    %c0_i32_0 = arith.constant 0 : i32
    %c0_i32_1 = arith.constant 0 : i32
    return %c0_i32, %c0_i32_0 : i32, i32
  }
  func.func @transform_7(%arg0: i32, %arg1: i32) -> (i32, i32) {
    %c0_i32 = arith.constant 0 : i32
    %c0_i32_0 = arith.constant 0 : i32
    %c0_i32_1 = arith.constant 0 : i32
    return %c0_i32, %c0_i32_0 : i32, i32
  }
  func.func @transform_8(%arg0: i32, %arg1: i32) -> (i32, i32, i32) {
    %c0_i32 = arith.constant 0 : i32
    %c0_i32_0 = arith.constant 0 : i32
    return %arg0, %c0_i32, %arg1 : i32, i32, i32
  }
}

</mosaic_0001>

<llo_original>
// kernel: tpu_custom_call.1
$region0: #{tpu_custom_call.1}
  #allocation0 [shape = 'u32[]', space=smem, size = 0x4, offset = 0x4, fixed_abs, tag = 'smem constant byte address 0x4 - core index']
  #allocation1 [shape = 'u32[144,128]{1,0:T(1,128)}', space=vmem, size = 0x12000, scoped, tag = 'internal scratch']
  #allocation2 [shape = 'f32[4,256]{1,0:T(4,128)}', space=vmem, size = 0x1000, scoped, tag = 'scratch operand']
  %s0 = inlined_call_operand.vmem [shape: f32[2,4,256], index: 0, kind: input, shape index: {}]
  %s1 = inlined_call_operand.vmem [shape: f32[9,256], index: 1, kind: input, shape index: {}]
  %s2 = inlined_call_operand.vmem [shape: f32[4,9], index: 2, kind: input, shape index: {}]
  %s3 = inlined_call_operand.vmem [shape: f32[4,1], index: 3, kind: input, shape index: {}]
  %s4 = inlined_call_operand.vmem [shape: bf16[32,4], index: 4, kind: input, shape index: {}]
  %s5 = inlined_call_operand.vmem [shape: f32[32,1], index: 5, kind: input, shape index: {}]
  %s6 = inlined_call_operand.vmem [shape: bf16[4,32], index: 6, kind: input, shape index: {}]
  %s7 = inlined_call_operand.vmem [shape: f32[4,1], index: 7, kind: input, shape index: {}]
  %s8 = inlined_call_operand.hbm [shape: f32[2,4,256], index: 8, kind: output, shape index: {}]
  %s9 = sld [smem:[#allocation0]]
  $region69: #{tpu_custom_call.1} parent=0
    _
  %s11 = ssub.s32 1, %s9
  %s12 = scalar_select 0, %s11, %s9
  $region1: #{tpu_custom_call.1} parent=0
    #allocation3 [shape = 'u8[8192]{0}', space=vmem, size = 0x2000, scoped, tag = 'output window, operand 0']
    #allocation4 [shape = 's32[2]{0}', space=sflag, size = 0x8, scoped, tag = 'scoped memory for tpu_custom_call.1']
    %13 = vsyncpa [#allocation4], 0
    %s14 = scalar_lea.sflag [#allocation4], 1
    %15 = vsyncpa %s14, 0
    loop: start=0, step=1, limit=4
    $region2: #{tpu_custom_call.1} parent=1 // loop_pre_header
      _
    $region3: #{tpu_custom_call.1} parent=1 // loop_header
      %s17 = sphi 0, %s21
      %p18 = scmp.ge.s32.totalorder %s17, 4
      %s24 = sphi 0, %s36
      %s25 = sphi 0, %s32
      %s26 = sphi 0, %s24
      %s27 = sphi 0, %s25
      %s28 = sphi 0, %s26
      %s29 = sphi 0, %s27
      %s39 = sphi 0, %s41
      %s42 = sphi 0, %s39
      %s43 = sphi 0, %s42
      %s59 = sphi 0, %s43
      %s63 = sphi 0, %s63
      %s65 = sphi 0, %s63
      %s66 = sphi 0, %s65
      %s80 = sphi 0, %s66
      %s84 = sphi 0, %s84
      %s86 = sphi 0, %s84
      %s87 = sphi 0, %s86
      %s101 = sphi 0, %s87
      %s105 = sphi 0, %s105
      %s107 = sphi 0, %s105
      %s108 = sphi 0, %s107
      %s122 = sphi 0, %s108
      %s126 = sphi 0, %s126
      %s128 = sphi 0, %s126
      %s129 = sphi 0, %s128
      %s143 = sphi 0, %s129
      %s147 = sphi 0, %s147
      %s149 = sphi 0, %s147
      %s150 = sphi 0, %s149
      %s164 = sphi 0, %s150
      %s168 = sphi 0, %s168
      %s170 = sphi 0, %s168
      %s171 = sphi 0, %s170
      %s185 = sphi 0, %s171
      %s189 = sphi 0, %s189
      %s191 = sphi 0, %s189
      %s192 = sphi 0, %s191
      %s206 = sphi 0, %s192
      %s214 = sphi 0, %s216
      %s217 = sphi 0, %s214
      %s218 = sphi 0, %s217
      %s234 = sphi 0, %s218
    $region4: #{tpu_custom_call.1} parent=1 // loop_header_branch
      %20 = sbr.rel (%p18) target = $region8
    $region5: #{tpu_custom_call.1} parent=1 // loop_body
      %s22 = ssub.s32 %s17, 1
      %s23 = ssub.s32 %s17, 2
      %s30 = sadd.s32 1, %s25
      %p31 = scmp.ge.s32.totalorder %s30, 1
      %s32 = scalar_select %p31, 0, %s30
      %s33 = sadd.s32 1, %s24
      %s34 = scalar_select %p31, %s33, %s24
      %p35 = scmp.ge.s32.totalorder %s34, 2
      %s36 = scalar_select %p35, 0, %s34
      %s37 = ssub.s32 %s24, %s36
      %p38 = scmp.eq.s32.totalorder %s37, 0
      %s40 = sadd.s32 %s39, 1
      %s41 = scalar_select %p38, %s39, %s40
      %p44 = pneg %p38
      %p45 = scmp.eq.s32.totalorder %s17, 1
      %p46 = por %p44, %p45
      %p47 = scmp.ne.s32.totalorder %s39, %s42
      %p48 = scmp.eq.s32.totalorder %s17, 0
      %p49 = por %p47, %p48
      %p50 = scmp.ne.s32.totalorder %s39, %s42
      %p51 = scmp.eq.s32.totalorder %s22, 1
      %p52 = por %p50, %p51
      %p53 = scmp.ne.s32.totalorder %s42, %s43
      %p54 = scmp.eq.s32.totalorder %s22, 0
      %p55 = por %p53, %p54
      %p56 = scmp.ne.s32.totalorder %s42, %s43
      %p57 = scmp.eq.s32.totalorder %s23, 1
      %p58 = por %p56, %p57
      %p60 = scmp.ne.s32.totalorder %s43, %s59
      %p61 = scmp.eq.s32.totalorder %s23, 0
      %p62 = por %p60, %p61
      %s64 = sadd.s32 %s63, 1
      %p67 = scmp.eq.s32.totalorder %s17, 1
      %p68 = scmp.ne.s32.totalorder %s63, %s65
      %p69 = scmp.eq.s32.totalorder %s17, 0
      %p70 = por %p68, %p69
      %p71 = scmp.ne.s32.totalorder %s63, %s65
      %p72 = scmp.eq.s32.totalorder %s22, 1
      %p73 = por %p71, %p72
      %p74 = scmp.ne.s32.totalorder %s65, %s66
      %p75 = scmp.eq.s32.totalorder %s22, 0
      %p76 = por %p74, %p75
      %p77 = scmp.ne.s32.totalorder %s65, %s66
      %p78 = scmp.eq.s32.totalorder %s23, 1
      %p79 = por %p77, %p78
      %p81 = scmp.ne.s32.totalorder %s66, %s80
      %p82 = scmp.eq.s32.totalorder %s23, 0
      %p83 = por %p81, %p82
      %s85 = sadd.s32 %s84, 1
      %p88 = scmp.eq.s32.totalorder %s17, 1
      %p89 = scmp.ne.s32.totalorder %s84, %s86
      %p90 = scmp.eq.s32.totalorder %s17, 0
      %p91 = por %p89, %p90
      %p92 = scmp.ne.s32.totalorder %s84, %s86
      %p93 = scmp.eq.s32.totalorder %s22, 1
      %p94 = por %p92, %p93
      %p95 = scmp.ne.s32.totalorder %s86, %s87
      %p96 = scmp.eq.s32.totalorder %s22, 0
      %p97 = por %p95, %p96
      %p98 = scmp.ne.s32.totalorder %s86, %s87
      %p99 = scmp.eq.s32.totalorder %s23, 1
      %p100 = por %p98, %p99
      %p102 = scmp.ne.s32.totalorder %s87, %s101
      %p103 = scmp.eq.s32.totalorder %s23, 0
      %p104 = por %p102, %p103
      %s106 = sadd.s32 %s105, 1
      %p109 = scmp.eq.s32.totalorder %s17, 1
      %p110 = scmp.ne.s32.totalorder %s105, %s107
      %p111 = scmp.eq.s32.totalorder %s17, 0
      %p112 = por %p110, %p111
      %p113 = scmp.ne.s32.totalorder %s105, %s107
      %p114 = scmp.eq.s32.totalorder %s22, 1
      %p115 = por %p113, %p114
      %p116 = scmp.ne.s32.totalorder %s107, %s108
      %p117 = scmp.eq.s32.totalorder %s22, 0
      %p118 = por %p116, %p117
      %p119 = scmp.ne.s32.totalorder %s107, %s108
      %p120 = scmp.eq.s32.totalorder %s23, 1
      %p121 = por %p119, %p120
      %p123 = scmp.ne.s32.totalorder %s108, %s122
      %p124 = scmp.eq.s32.totalorder %s23, 0
      %p125 = por %p123, %p124
      %s127 = sadd.s32 %s126, 1
      %p130 = scmp.eq.s32.totalorder %s17, 1
      %p131 = scmp.ne.s32.totalorder %s126, %s128
      %p132 = scmp.eq.s32.totalorder %s17, 0
      %p133 = por %p131, %p132
      %p134 = scmp.ne.s32.totalorder %s126, %s128
      %p135 = scmp.eq.s32.totalorder %s22, 1
      %p136 = por %p134, %p135
      %p137 = scmp.ne.s32.totalorder %s128, %s129
      %p138 = scmp.eq.s32.totalorder %s22, 0
      %p139 = por %p137, %p138
      %p140 = scmp.ne.s32.totalorder %s128, %s129
      %p141 = scmp.eq.s32.totalorder %s23, 1
      %p142 = por %p140, %p141
      %p144 = scmp.ne.s32.totalorder %s129, %s143
      %p145 = scmp.eq.s32.totalorder %s23, 0
      %p146 = por %p144, %p145
      %s148 = sadd.s32 %s147, 1
      %p151 = scmp.eq.s32.totalorder %s17, 1
      %p152 = scmp.ne.s32.totalorder %s147, %s149
      %p153 = scmp.eq.s32.totalorder %s17, 0
      %p154 = por %p152, %p153
      %p155 = scmp.ne.s32.totalorder %s147, %s149
      %p156 = scmp.eq.s32.totalorder %s22, 1
      %p157 = por %p155, %p156
      %p158 = scmp.ne.s32.totalorder %s149, %s150
      %p159 = scmp.eq.s32.totalorder %s22, 0
      %p160 = por %p158, %p159
      %p161 = scmp.ne.s32.totalorder %s149, %s150
      %p162 = scmp.eq.s32.totalorder %s23, 1
      %p163 = por %p161, %p162
      %p165 = scmp.ne.s32.totalorder %s150, %s164
      %p166 = scmp.eq.s32.totalorder %s23, 0
      %p167 = por %p165, %p166
      %s169 = sadd.s32 %s168, 1
      %p172 = scmp.eq.s32.totalorder %s17, 1
      %p173 = scmp.ne.s32.totalorder %s168, %s170
      %p174 = scmp.eq.s32.totalorder %s17, 0
      %p175 = por %p173, %p174
      %p176 = scmp.ne.s32.totalorder %s168, %s170
      %p177 = scmp.eq.s32.totalorder %s22, 1
      %p178 = por %p176, %p177
      %p179 = scmp.ne.s32.totalorder %s170, %s171
      %p180 = scmp.eq.s32.totalorder %s22, 0
      %p181 = por %p179, %p180
      %p182 = scmp.ne.s32.totalorder %s170, %s171
      %p183 = scmp.eq.s32.totalorder %s23, 1
      %p184 = por %p182, %p183
      %p186 = scmp.ne.s32.totalorder %s171, %s185
      %p187 = scmp.eq.s32.totalorder %s23, 0
      %p188 = por %p186, %p187
      %s190 = sadd.s32 %s189, 1
      %p193 = scmp.eq.s32.totalorder %s17, 1
      %p194 = scmp.ne.s32.totalorder %s189, %s191
      %p195 = scmp.eq.s32.totalorder %s17, 0
      %p196 = por %p194, %p195
      %p197 = scmp.ne.s32.totalorder %s189, %s191
      %p198 = scmp.eq.s32.totalorder %s22, 1
      %p199 = por %p197, %p198
      %p200 = scmp.ne.s32.totalorder %s191, %s192
      %p201 = scmp.eq.s32.totalorder %s22, 0
      %p202 = por %p200, %p201
      %p203 = scmp.ne.s32.totalorder %s191, %s192
      %p204 = scmp.eq.s32.totalorder %s23, 1
      %p205 = por %p203, %p204
      %p207 = scmp.ne.s32.totalorder %s192, %s206
      %p208 = scmp.eq.s32.totalorder %s23, 0
      %p209 = por %p207, %p208
      %s210 = ssub.s32 %s24, %s36
      %s211 = ssub.s32 %s25, %s32
      %s212 = sor.u32 %s210, %s211
      %p213 = scmp.eq.s32.totalorder %s212, 0
      %s215 = sadd.s32 %s214, 1
      %s216 = scalar_select %p213, %s214, %s215
      %p219 = pneg %p213
      %p220 = scmp.eq.s32.totalorder %s17, 1
      %p221 = por %p219, %p220
      %p222 = scmp.ne.s32.totalorder %s214, %s217
      %p223 = scmp.eq.s32.totalorder %s17, 0
      %p224 = por %p222, %p223
      %p225 = scmp.ne.s32.totalorder %s214, %s217
      %p226 = scmp.eq.s32.totalorder %s22, 1
      %p227 = por %p225, %p226
      %p228 = scmp.ne.s32.totalorder %s217, %s218
      %p229 = scmp.eq.s32.totalorder %s22, 0
      %p230 = por %p228, %p229
      %p231 = scmp.ne.s32.totalorder %s217, %s218
      %p232 = scmp.eq.s32.totalorder %s23, 1
      %p233 = por %p231, %p232
      %p235 = scmp.ne.s32.totalorder %s218, %s234
      %p236 = scmp.eq.s32.totalorder %s23, 0
      %p237 = por %p235, %p236
      %p238 = scmp.le.s32.totalorder 1, %s17
      %p239 = scmp.lt.s32.totalorder %s17, 3
      %p240 = pnand %p238, %p239
      %p241 = pneg %p240
      // Predicated region
      $region9: #{tpu_custom_call.1} parent=5 // pred_check
        _
      $region10: #{tpu_custom_call.1} parent=5 // pred_check_branch
        %243 = sbr.rel (%p240) target = $region12
      $region11: #{tpu_custom_call.1} parent=5 // pred_region
        %s244 = ssub.s32 %s17, 1
        // Predicated region
        $region13: #{tpu_custom_call.1} parent=11 // pred_check
          %p245 = pneg %p76
        $region14: #{tpu_custom_call.1} parent=11 // pred_check_branch
          %247 = sbr.rel (%p245) target = $region16
        $region15: #{tpu_custom_call.1} parent=11 // pred_region
          _
        $region16: #{tpu_custom_call.1} parent=11 // pred_fallthru
          _
        // Predicated region
        $region17: #{tpu_custom_call.1} parent=11 // pred_check
          %p248 = pneg %p97
        $region18: #{tpu_custom_call.1} parent=11 // pred_check_branch
          %250 = sbr.rel (%p248) target = $region20
        $region19: #{tpu_custom_call.1} parent=11 // pred_region
          _
        $region20: #{tpu_custom_call.1} parent=11 // pred_fallthru
          _
        // Predicated region
        $region21: #{tpu_custom_call.1} parent=11 // pred_check
          %p251 = pneg %p118
        $region22: #{tpu_custom_call.1} parent=11 // pred_check_branch
          %253 = sbr.rel (%p251) target = $region24
        $region23: #{tpu_custom_call.1} parent=11 // pred_region
          _
        $region24: #{tpu_custom_call.1} parent=11 // pred_fallthru
          _
        // Predicated region
        $region25: #{tpu_custom_call.1} parent=11 // pred_check
          %p254 = pneg %p139
        $region26: #{tpu_custom_call.1} parent=11 // pred_check_branch
          %256 = sbr.rel (%p254) target = $region28
        $region27: #{tpu_custom_call.1} parent=11 // pred_region
          _
        $region28: #{tpu_custom_call.1} parent=11 // pred_fallthru
          _
        // Predicated region
        $region29: #{tpu_custom_call.1} parent=11 // pred_check
          %p257 = pneg %p160
        $region30: #{tpu_custom_call.1} parent=11 // pred_check_branch
          %259 = sbr.rel (%p257) target = $region32
        $region31: #{tpu_custom_call.1} parent=11 // pred_region
          _
        $region32: #{tpu_custom_call.1} parent=11 // pred_fallthru
          _
        // Predicated region
        $region33: #{tpu_custom_call.1} parent=11 // pred_check
          %p260 = pneg %p181
        $region34: #{tpu_custom_call.1} parent=11 // pred_check_branch
          %262 = sbr.rel (%p260) target = $region36
        $region35: #{tpu_custom_call.1} parent=11 // pred_region
          _
        $region36: #{tpu_custom_call.1} parent=11 // pred_fallthru
          _
        // Predicated region
        $region37: #{tpu_custom_call.1} parent=11 // pred_check
          %p263 = pneg %p202
        $region38: #{tpu_custom_call.1} parent=11 // pred_check_branch
          %265 = sbr.rel (%p263) target = $region40
        $region39: #{tpu_custom_call.1} parent=11 // pred_region
          _
        $region40: #{tpu_custom_call.1} parent=11 // pred_fallthru
          _
      $region12: #{tpu_custom_call.1} parent=5 // pred_fallthru
        _
      %p266 = scmp.lt.s32.totalorder %s17, 2
      // Predicated region
      $region41: #{tpu_custom_call.1} parent=5 // pred_check
        %p267 = pneg %p266
      $region42: #{tpu_custom_call.1} parent=5 // pred_check_branch
        %269 = sbr.rel (%p267) target = $region44
      $region43: #{tpu_custom_call.1} parent=5 // pred_region
        // Predicated region
        $region45: #{tpu_custom_call.1} parent=43 // pred_check
          %p270 = pneg %p49
        $region46: #{tpu_custom_call.1} parent=43 // pred_check_branch
          %272 = sbr.rel (%p270) target = $region48
        $region47: #{tpu_custom_call.1} parent=43 // pred_region
          %p273 = scmp.lt.s32.totalorder %s24, 1
          %s274 = scalar_select %p273, %s24, 1
          %s275 = smul.addr %s274, 2
          %s276 = smul.addr %s275, 4
          %s277 = scalar_lea.vmem %s0, %s276
        $region48: #{tpu_custom_call.1} parent=43 // pred_fallthru
          _
      $region44: #{tpu_custom_call.1} parent=5 // pred_fallthru
        _
      %p278 = scmp.le.s32.totalorder 1, %s17
      %p279 = scmp.lt.s32.totalorder %s17, 3
      %p280 = pnand %p278, %p279
      %p281 = pneg %p280
      // Predicated region
      $region49: #{tpu_custom_call.1} parent=5 // pred_check
        _
      $region50: #{tpu_custom_call.1} parent=5 // pred_check_branch
        %283 = sbr.rel (%p280) target = $region52
      $region51: #{tpu_custom_call.1} parent=5 // pred_region
        %s284 = ssub.s32 %s17, 1
        %p285 = scmp.lt.s32.totalorder %s26, 1
        %s286 = scalar_select %p285, %s26, 1
        %s287 = smul.addr %s286, 2
        %s288 = smul.addr %s287, 4
        %s289 = scalar_lea.vmem %s0, %s288
        %p290 = pneg %p55
        %p291 = pneg %p52
        %p292 = pneg %p76
        %p293 = pneg %p73
        %p294 = pneg %p97
        %p295 = pneg %p94
        %p296 = pneg %p118
        %p297 = pneg %p115
        %p298 = pneg %p139
        %p299 = pneg %p136
        %p300 = pneg %p160
        %p301 = pneg %p157
        %p302 = pneg %p181
        %p303 = pneg %p178
        %p304 = pneg %p202
        %p305 = pneg %p199
        %p306 = pneg %p230
        %p307 = pneg %p227
        %s308 = sand.u32 %s217, 1
        %s309 = scalar_lea.sflag [#allocation4], %s308
        %s310 = sand.u32 %s217, 1
        %s311 = smul.addr %s310, 8
        %s312 = scalar_lea.vmem [#allocation3], %s311
        %p313 = scmp.lt.s32.totalorder %s26, 1
        %s314 = scalar_select %p313, %s26, 1
        %s315 = smul.addr %s314, 2
        %s316 = smul.addr %s315, 4
        %s317 = scalar_lea.vmem %s0, %s316
        %s318 = smul.u32 2, %s27
        %p320 = scmp.eq.s32.totalorder %s27, 0
        // Predicated region
        $region53: #{tpu_custom_call.1} parent=51 // pred_check
          %p321 = pneg %p320
        $region54: #{tpu_custom_call.1} parent=51 // pred_check_branch
          %323 = sbr.rel (%p321) target = $region56
        $region55: #{tpu_custom_call.1} parent=51 // pred_region
          %v324 = vld [vmem:[%s317] sm:$0xff]
          %v325 = vld [vmem:[%s2] sm:$0xf]
          %v326 = vld [vmem:[%s1] sm:$0xff]
          %v327 = vld [vmem:[%s1 + $0x8] sm:$0xff]
          %v328 = vld [vmem:[%s1 + $0x10] sm:$0x1]
          %v329 = vld [vmem:[%s1 + $0x18] sm:$0x1]
          %331 = vset.pattern.permute.xlu0 4
          %332 = vperm.xlu0 %331, %v325
          %v333 = vpop.permute.xlu0 %332
          %v335 = vunpack.c.l.s4 839922192
          %v336 = vunpack.c.0.s8 %v335
          %v337 = vlaneseq
          %v338 = vshrl.u32 %v337, 7
          %v339 = vsub.s32 %v336, %v338
          %v340 = vrot.slane %v333, %v339
          %v342 = vmul.f32 %v324, %v340
          %v344 = vcombine.high %v324, %v324
          %346 = vrot.lane.b32.xlu0 %v324, 17
          %v347 = vpop.permute.xlu0 %346
          %348 = vrot.lane.b32.xlu0 %v344, 17
          %v349 = vpop.permute.xlu0 %348
          %v350 = vlaneseq
          %v351 = vand.u32 %v350, 127
          %vm352 = vcmp.lt.s32.totalorder %v351, 17
          %v353 = vsel %vm352, %v347, %v349
          %v354 = vsel %vm352, %v349, %v347
          %v355 = vlaneseq
          %v356 = vshrl.u32 %v355, 7
          %v357 = vsub.s32 0, %v356
          %v358 = vrot.slane %v326, %v357
          %v359 = vlaneseq
          %v360 = vshrl.u32 %v359, 7
          %v361 = vsub.s32 0, %v360
          %v362 = vrot.slane %v327, %v361
          %v363 = vmul.f32 %v354, %v358
          %v364 = vmul.f32 %v353, %v362
          %365 = vset.pattern.permute.xlu0 0
          %366 = vperm.xlu0 %365, %v325
          %v367 = vpop.permute.xlu0 %366
          %v369 = vmul.f32 %v363, %v367
          %v370 = vmul.f32 %v364, %v367
          %v373 = vcombine.low %v369, %v370
          %v375 = vadd.f32 %v342, %v373
          %376 = vrot.lane.b32.xlu0 %v324, 16
          %v377 = vpop.permute.xlu0 %376
          %378 = vrot.lane.b32.xlu0 %v344, 16
          %v379 = vpop.permute.xlu0 %378
          %vm380 = vcmp.lt.s32.totalorder %v351, 16
          %v381 = vsel %vm380, %v377, %v379
          %v382 = vsel %vm380, %v379, %v377
          %v383 = vlaneseq
          %v384 = vshrl.u32 %v383, 7
          %v385 = vsub.s32 1, %v384
          %v386 = vrot.slane %v326, %v385
          %v387 = vlaneseq
          %v388 = vshrl.u32 %v387, 7
          %v389 = vsub.s32 1, %v388
          %v390 = vrot.slane %v327, %v389
          %v391 = vmul.f32 %v382, %v386
          %v392 = vmul.f32 %v381, %v390
          %393 = vset.pattern.permute.xlu0 1
          %394 = vperm.xlu0 %393, %v325
          %v395 = vpop.permute.xlu0 %394
          %v397 = vmul.f32 %v391, %v395
          %v398 = vmul.f32 %v392, %v395
          %v401 = vcombine.low %v397, %v398
          %v403 = vadd.f32 %v375, %v401
          %404 = vrot.lane.b32.xlu0 %v324, 15
          %v405 = vpop.permute.xlu0 %404
          %406 = vrot.lane.b32.xlu0 %v344, 15
          %v407 = vpop.permute.xlu0 %406
          %vm408 = vcmp.lt.s32.totalorder %v351, 15
          %v409 = vsel %vm408, %v405, %v407
          %v410 = vsel %vm408, %v407, %v405
          %v411 = vlaneseq
          %v412 = vshrl.u32 %v411, 7
          %v413 = vsub.s32 2, %v412
          %v414 = vrot.slane %v326, %v413
          %v415 = vlaneseq
          %v416 = vshrl.u32 %v415, 7
          %v417 = vsub.s32 2, %v416
          %v418 = vrot.slane %v327, %v417
          %v419 = vmul.f32 %v410, %v414
          %v420 = vmul.f32 %v409, %v418
          %421 = vset.pattern.permute.xlu0 2
          %422 = vperm.xlu0 %421, %v325
          %v423 = vpop.permute.xlu0 %422
          %v425 = vmul.f32 %v419, %v423
          %v426 = vmul.f32 %v420, %v423
          %v429 = vcombine.low %v425, %v426
          %v431 = vadd.f32 %v403, %v429
          %432 = vrot.lane.b32.xlu0 %v324, 1
          %v433 = vpop.permute.xlu0 %432
          %434 = vrot.lane.b32.xlu0 %v344, 1
          %v435 = vpop.permute.xlu0 %434
          %vm436 = vcmp.lt.s32.totalorder %v351, 1
          %v437 = vsel %vm436, %v433, %v435
          %v438 = vsel %vm436, %v435, %v433
          %v439 = vlaneseq
          %v440 = vshrl.u32 %v439, 7
          %v441 = vsub.s32 3, %v440
          %v442 = vrot.slane %v326, %v441
          %v443 = vlaneseq
          %v444 = vshrl.u32 %v443, 7
          %v445 = vsub.s32 3, %v444
          %v446 = vrot.slane %v327, %v445
          %v447 = vmul.f32 %v438, %v442
          %v448 = vmul.f32 %v437, %v446
          %449 = vset.pattern.permute.xlu0 3
          %450 = vperm.xlu0 %449, %v325
          %v451 = vpop.permute.xlu0 %450
          %v453 = vmul.f32 %v447, %v451
          %v454 = vmul.f32 %v448, %v451
          %v457 = vcombine.low %v453, %v454
          %v459 = vadd.f32 %v431, %v457
          %460 = vrot.lane.b32.xlu0 %v324, 127
          %v461 = vpop.permute.xlu0 %460
          %462 = vrot.lane.b32.xlu0 %v344, 127
          %v463 = vpop.permute.xlu0 %462
          %vm464 = vcmp.lt.s32.totalorder %v351, 127
          %v465 = vsel %vm464, %v461, %v463
          %v466 = vsel %vm464, %v463, %v461
          %v467 = vlaneseq
          %v468 = vshrl.u32 %v467, 7
          %v469 = vsub.s32 5, %v468
          %v470 = vrot.slane %v326, %v469
          %v471 = vlaneseq
          %v472 = vshrl.u32 %v471, 7
          %v473 = vsub.s32 5, %v472
          %v474 = vrot.slane %v327, %v473
          %v475 = vmul.f32 %v465, %v470
          %v476 = vmul.f32 %v466, %v474
          %477 = vset.pattern.permute.xlu0 5
          %478 = vperm.xlu0 %477, %v325
          %v479 = vpop.permute.xlu0 %478
          %v481 = vmul.f32 %v475, %v479
          %v482 = vmul.f32 %v476, %v479
          %v485 = vcombine.low %v481, %v482
          %v487 = vadd.f32 %v459, %v485
          %488 = vrot.lane.b32.xlu0 %v324, 113
          %v489 = vpop.permute.xlu0 %488
          %490 = vrot.lane.b32.xlu0 %v344, 113
          %v491 = vpop.permute.xlu0 %490
          %vm492 = vcmp.lt.s32.totalorder %v351, 113
          %v493 = vsel %vm492, %v489, %v491
          %v494 = vsel %vm492, %v491, %v489
          %v495 = vlaneseq
          %v496 = vshrl.u32 %v495, 7
          %v497 = vsub.s32 6, %v496
          %v498 = vrot.slane %v326, %v497
          %v499 = vlaneseq
          %v500 = vshrl.u32 %v499, 7
          %v501 = vsub.s32 6, %v500
          %v502 = vrot.slane %v327, %v501
          %v503 = vmul.f32 %v493, %v498
          %v504 = vmul.f32 %v494, %v502
          %505 = vset.pattern.permute.xlu0 6
          %506 = vperm.xlu0 %505, %v325
          %v507 = vpop.permute.xlu0 %506
          %v509 = vmul.f32 %v503, %v507
          %v510 = vmul.f32 %v504, %v507
          %v513 = vcombine.low %v509, %v510
          %v515 = vadd.f32 %v487, %v513
          %516 = vrot.lane.b32.xlu0 %v324, 112
          %v517 = vpop.permute.xlu0 %516
          %518 = vrot.lane.b32.xlu0 %v344, 112
          %v519 = vpop.permute.xlu0 %518
          %vm520 = vcmp.lt.s32.totalorder %v351, 112
          %v521 = vsel %vm520, %v517, %v519
          %v522 = vsel %vm520, %v519, %v517
          %v523 = vlaneseq
          %v524 = vshrl.u32 %v523, 7
          %v525 = vsub.s32 7, %v524
          %v526 = vrot.slane %v326, %v525
          %v527 = vlaneseq
          %v528 = vshrl.u32 %v527, 7
          %v529 = vsub.s32 7, %v528
          %v530 = vrot.slane %v327, %v529
          %v531 = vmul.f32 %v521, %v526
          %v532 = vmul.f32 %v522, %v530
          %533 = vset.pattern.permute.xlu0 7
          %534 = vperm.xlu0 %533, %v325
          %v535 = vpop.permute.xlu0 %534
          %v537 = vmul.f32 %v531, %v535
          %v538 = vmul.f32 %v532, %v535
          %v541 = vcombine.low %v537, %v538
          %v543 = vadd.f32 %v515, %v541
          %544 = vrot.lane.b32.xlu0 %v324, 111
          %v545 = vpop.permute.xlu0 %544
          %546 = vrot.lane.b32.xlu0 %v344, 111
          %v547 = vpop.permute.xlu0 %546
          %vm548 = vcmp.lt.s32.totalorder %v351, 111
          %v549 = vsel %vm548, %v545, %v547
          %v550 = vsel %vm548, %v547, %v545
          %v551 = vlaneseq
          %v552 = vshrl.u32 %v551, 7
          %v553 = vsub.s32 0, %v552
          %v554 = vrot.slane %v328, %v553
          %v555 = vlaneseq
          %v556 = vshrl.u32 %v555, 7
          %v557 = vsub.s32 0, %v556
          %v558 = vrot.slane %v329, %v557
          %v559 = vmul.f32 %v549, %v554
          %v560 = vmul.f32 %v550, %v558
          %561 = vset.pattern.permute.xlu0 8
          %562 = vperm.xlu0 %561, %v325
          %v563 = vpop.permute.xlu0 %562
          %v565 = vmul.f32 %v559, %v563
          %v566 = vmul.f32 %v560, %v563
          %v569 = vcombine.low %v565, %v566
          %v571 = vadd.f32 %v543, %v569
          %v572 = vld [vmem:[%s3] sm:$0xf]
          %574 = vset.pattern.permute.xlu0 0
          %575 = vperm.xlu0 %574, %v572
          %v576 = vpop.permute.xlu0 %575
          %v578 = vunpack.c.l.s4 839922192
          %v579 = vunpack.c.0.s8 %v578
          %v580 = vlaneseq
          %v581 = vshrl.u32 %v580, 7
          %v582 = vsub.s32 %v579, %v581
          %v583 = vrot.slane %v576, %v582
          %v585 = vadd.f32 %v571, %v583
          %586 = vst [vmem:[#allocation2] sm:$0xff] %v585
        $region56: #{tpu_custom_call.1} parent=51 // pred_fallthru
          _
        %s587 = smul.u32 %s27, 256
        %s588 = sshra.s32 %s587, 7
        %s589 = sand.u32 %s587, 127
        %s590 = smul.addr %s588, 4
        %s591 = scalar_lea.vmem [#allocation2], %s590
        %v592 = vld [vmem:[%s591] sm:$0xff]
        %s593 = smul.addr %s588, 4
        %s594 = scalar_lea.vmem %s317, %s593
        %v595 = vld [vmem:[%s594] sm:$0xff]
        %v596 = vld [vmem:[%s4] sm:$0xf]
        %v597 = vld [vmem:[%s4 + $0x4] sm:$0xf]
        %v598 = vld [vmem:[%s4 + $0x8] sm:$0xf]
        %v599 = vld [vmem:[%s4 + $0xc] sm:$0xf]
        %v601 = vcombine.high %v592, %v592
        %v603 = vpack.c.bf16 %v592, %v592
        %v604 = vpack.c.bf16 %v601, %v601
        %v605 = vld [vmem:[%s5] sm:$0xff]
        %v606 = vld [vmem:[%s5 + $0x8] sm:$0xff]
        %v607 = vld [vmem:[%s5 + $0x10] sm:$0xff]
        %v608 = vld [vmem:[%s5 + $0x18] sm:$0xff]
        %610 = vset.pattern.permute.xlu0 0
        %611 = vperm.xlu0 %610, %v605
        %v612 = vpop.permute.xlu0 %611
        %615 = vset.pattern.permute.xlu0 0
        %616 = vperm.xlu0 %615, %v606
        %v617 = vpop.permute.xlu0 %616
        %620 = vset.pattern.permute.xlu0 0
        %621 = vperm.xlu0 %620, %v607
        %v622 = vpop.permute.xlu0 %621
        %625 = vset.pattern.permute.xlu0 0
        %626 = vperm.xlu0 %625, %v608
        %v627 = vpop.permute.xlu0 %626
        %v633 = vunpack.c.l.b16 %v596
        %v634 = vunpack.c.l.b16 %v597
        %v635 = vunpack.c.l.b16 %v598
        %v636 = vunpack.c.l.b16 %v599
        %v637 = vpack.c.b16 %v634, %v633
        %v638 = vpack.c.b16 %v636, %v635
        %vm639 = vcmask 31744
        %v641 = vsel %vm639, %v637, 0
        %v644 = vsel %vm639, %v638, 0
        %vm646 = vcmask 1041408
        %v648 = vsel %vm646, %v603, 0
        %v651 = vsel %vm646, %v604, 0
        %653 = vmatprep.subr.bf16.mxu0 %v651
        %654 = vmatpush1.bf16.msra.mxu0 %v648
        %655 = vmatprep.subr.bf16.mxu0 0
        %656 = vmatpush1.bf16.msra.mxu0 0
        %657 = vmatprep.subr.bf16.mxu0 0
        %658 = vmatpush1.bf16.msra.mxu0 0
        %659 = vmatprep.subr.bf16.mxu0 0
        %660 = vmatpush1.bf16.msra.mxu0 0
        %661 = vmatprep.subr.bf16.mxu0 0
        %662 = vmatpush1.bf16.msra.mxu0 0
        %663 = vmatprep.subr.bf16.mxu0 0
        %664 = vmatpush1.bf16.msra.mxu0 0
        %665 = vmatprep.subr.bf16.mxu0 0
        %666 = vmatpush1.bf16.msra.mxu0 0
        %667 = vmatprep.subr.bf16.mxu0 0
        %668 = vmatpush1.bf16.msra.mxu0 0
        %669 = vmatprep.subr.bf16.mxu0 0
        %670 = vmatpush1.bf16.msra.mxu0 0
        %671 = vmatprep.subr.bf16.mxu0 0
        %672 = vmatpush1.bf16.msra.mxu0 0
        %673 = vmatprep.subr.bf16.mxu0 0
        %674 = vmatpush1.bf16.msra.mxu0 0
        %675 = vmatprep.subr.bf16.mxu0 0
        %676 = vmatpush1.bf16.msra.mxu0 0
        %677 = vmatprep.subr.bf16.mxu0 0
        %678 = vmatpush1.bf16.msra.mxu0 0
        %679 = vmatprep.subr.bf16.mxu0 0
        %680 = vmatpush1.bf16.msra.mxu0 0
        %681 = vmatprep.subr.bf16.mxu0 0
        %682 = vmatpush1.bf16.msra.mxu0 0
        %683 = vmatprep.subr.bf16.mxu0 0
        %684 = vmatpush1.bf16.msra.mxu0 0
        %685 = vmatprep.mubr.bf16.mxu0 0
        %686 = vmatmul.mubr.bf16.gmra.mrb[0].mxu0 %v641
        %v687 = vpop.f32.mrb[0].mxu0
        %v688 = vadd.f32 %v612, %v687
        %v689 = vpop.f32.mrb[0].mxu0
        %v690 = vadd.f32 %v612, %v689
        %v691 = vpop.f32.mrb[0].mxu0
        %v692 = vadd.f32 %v617, %v691
        %v693 = vpop.f32.mrb[0].mxu0
        %v694 = vadd.f32 %v617, %v693
        %695 = vmatprep.mubr.bf16.mxu0 0
        %696 = vmatmul.mubr.bf16.gmra.mrb[0].mxu0 %v644
        %v697 = vpop.f32.mrb[0].mxu0
        %v698 = vadd.f32 %v622, %v697
        %v699 = vpop.f32.mrb[0].mxu0
        %v700 = vadd.f32 %v622, %v699
        %v701 = vpop.f32.mrb[0].mxu0
        %v702 = vadd.f32 %v627, %v701
        %v703 = vpop.f32.mrb[0].mxu0
        %v704 = vadd.f32 %v627, %v703
        %705 = vdwg.mxu0
        %v706 = vmul.f32 %v688, 0.70710677
        %v707 = vmul.f32 %v690, 0.70710677
        %v708 = vmul.f32 %v692, 0.70710677
        %v709 = vmul.f32 %v694, 0.70710677
        %v710 = vmul.f32 %v698, 0.70710677
        %v711 = vmul.f32 %v700, 0.70710677
        %v712 = vmul.f32 %v702, 0.70710677
        %v713 = vmul.f32 %v704, 0.70710677
        %vm714 = vcmp.ge.f32.partialorder %v706, 0.0
        %vm715 = vcmp.ge.f32.partialorder %v707, 0.0
        %vm716 = vcmp.ge.f32.partialorder %v708, 0.0
        %vm717 = vcmp.ge.f32.partialorder %v709, 0.0
        %vm718 = vcmp.ge.f32.partialorder %v710, 0.0
        %vm719 = vcmp.ge.f32.partialorder %v711, 0.0
        %vm720 = vcmp.ge.f32.partialorder %v712, 0.0
        %vm721 = vcmp.ge.f32.partialorder %v713, 0.0
        %v722 = vsel %vm714, 1.0, -1.0
        %v723 = vsel %vm715, 1.0, -1.0
        %v724 = vsel %vm716, 1.0, -1.0
        %v725 = vsel %vm717, 1.0, -1.0
        %v726 = vsel %vm718, 1.0, -1.0
        %v727 = vsel %vm719, 1.0, -1.0
        %v728 = vsel %vm720, 1.0, -1.0
        %v729 = vsel %vm721, 1.0, -1.0
        %v730 = vand.u32 2147483647, %v706
        %v731 = vand.u32 2147483647, %v707
        %v732 = vand.u32 2147483647, %v708
        %v733 = vand.u32 2147483647, %v709
        %v734 = vand.u32 2147483647, %v710
        %v735 = vand.u32 2147483647, %v711
        %v736 = vand.u32 2147483647, %v712
        %v737 = vand.u32 2147483647, %v713
        %v738 = vmul.f32 %v730, 0.3275911
        %v739 = vmul.f32 %v731, 0.3275911
        %v740 = vmul.f32 %v732, 0.3275911
        %v741 = vmul.f32 %v733, 0.3275911
        %v742 = vmul.f32 %v734, 0.3275911
        %v743 = vmul.f32 %v735, 0.3275911
        %v744 = vmul.f32 %v736, 0.3275911
        %v745 = vmul.f32 %v737, 0.3275911
        %v746 = vadd.f32 %v738, 1.0
        %v747 = vadd.f32 %v739, 1.0
        %v748 = vadd.f32 %v740, 1.0
        %v749 = vadd.f32 %v741, 1.0
        %v750 = vadd.f32 %v742, 1.0
        %v751 = vadd.f32 %v743, 1.0
        %v752 = vadd.f32 %v744, 1.0
        %v753 = vadd.f32 %v745, 1.0
        %v754 = vrcp.pop %v746
        %v755 = vrcp.pop %v747
        %v756 = vrcp.pop %v748
        %v757 = vrcp.pop %v749
        %v758 = vrcp.pop %v750
        %v759 = vrcp.pop %v751
        %v760 = vrcp.pop %v752
        %v761 = vrcp.pop %v753
        %v762 = vmul.f32 %v754, 1.0614054
        %v763 = vmul.f32 %v755, 1.0614054
        %v764 = vmul.f32 %v756, 1.0614054
        %v765 = vmul.f32 %v757, 1.0614054
        %v766 = vmul.f32 %v758, 1.0614054
        %v767 = vmul.f32 %v759, 1.0614054
        %v768 = vmul.f32 %v760, 1.0614054
        %v769 = vmul.f32 %v761, 1.0614054
        %v770 = vadd.f32 %v762, -1.4531521
        %v771 = vadd.f32 %v763, -1.4531521
        %v772 = vadd.f32 %v764, -1.4531521
        %v773 = vadd.f32 %v765, -1.4531521
        %v774 = vadd.f32 %v766, -1.4531521
        %v775 = vadd.f32 %v767, -1.4531521
        %v776 = vadd.f32 %v768, -1.4531521
        %v777 = vadd.f32 %v769, -1.4531521
        %v778 = vmul.f32 %v770, %v754
        %v779 = vmul.f32 %v771, %v755
        %v780 = vmul.f32 %v772, %v756
        %v781 = vmul.f32 %v773, %v757
        %v782 = vmul.f32 %v774, %v758
        %v783 = vmul.f32 %v775, %v759
        %v784 = vmul.f32 %v776, %v760
        %v785 = vmul.f32 %v777, %v761
        %v786 = vadd.f32 %v778, 1.4214138
        %v787 = vadd.f32 %v779, 1.4214138
        %v788 = vadd.f32 %v780, 1.4214138
        %v789 = vadd.f32 %v781, 1.4214138
        %v790 = vadd.f32 %v782, 1.4214138
        %v791 = vadd.f32 %v783, 1.4214138
        %v792 = vadd.f32 %v784, 1.4214138
        %v793 = vadd.f32 %v785, 1.4214138
        %v794 = vmul.f32 %v786, %v754
        %v795 = vmul.f32 %v787, %v755
        %v796 = vmul.f32 %v788, %v756
        %v797 = vmul.f32 %v789, %v757
        %v798 = vmul.f32 %v790, %v758
        %v799 = vmul.f32 %v791, %v759
        %v800 = vmul.f32 %v792, %v760
        %v801 = vmul.f32 %v793, %v761
        %v802 = vadd.f32 %v794, -0.28449672
        %v803 = vadd.f32 %v795, -0.28449672
        %v804 = vadd.f32 %v796, -0.28449672
        %v805 = vadd.f32 %v797, -0.28449672
        %v806 = vadd.f32 %v798, -0.28449672
        %v807 = vadd.f32 %v799, -0.28449672
        %v808 = vadd.f32 %v800, -0.28449672
        %v809 = vadd.f32 %v801, -0.28449672
        %v810 = vmul.f32 %v802, %v754
        %v811 = vmul.f32 %v803, %v755
        %v812 = vmul.f32 %v804, %v756
        %v813 = vmul.f32 %v805, %v757
        %v814 = vmul.f32 %v806, %v758
        %v815 = vmul.f32 %v807, %v759
        %v816 = vmul.f32 %v808, %v760
        %v817 = vmul.f32 %v809, %v761
        %v818 = vadd.f32 %v810, 0.2548296
        %v819 = vadd.f32 %v811, 0.2548296
        %v820 = vadd.f32 %v812, 0.2548296
        %v821 = vadd.f32 %v813, 0.2548296
        %v822 = vadd.f32 %v814, 0.2548296
        %v823 = vadd.f32 %v815, 0.2548296
        %v824 = vadd.f32 %v816, 0.2548296
        %v825 = vadd.f32 %v817, 0.2548296
        %v826 = vmul.f32 %v818, %v754
        %v827 = vmul.f32 %v819, %v755
        %v828 = vmul.f32 %v820, %v756
        %v829 = vmul.f32 %v821, %v757
        %v830 = vmul.f32 %v822, %v758
        %v831 = vmul.f32 %v823, %v759
        %v832 = vmul.f32 %v824, %v760
        %v833 = vmul.f32 %v825, %v761
        %v834 = vsub.f32 0.0, %v730
        %v835 = vsub.f32 0.0, %v731
        %v836 = vsub.f32 0.0, %v732
        %v837 = vsub.f32 0.0, %v733
        %v838 = vsub.f32 0.0, %v734
        %v839 = vsub.f32 0.0, %v735
        %v840 = vsub.f32 0.0, %v736
        %v841 = vsub.f32 0.0, %v737
        %v842 = vmul.f32 %v834, %v730
        %v843 = vmul.f32 %v835, %v731
        %v844 = vmul.f32 %v836, %v732
        %v845 = vmul.f32 %v837, %v733
        %v846 = vmul.f32 %v838, %v734
        %v847 = vmul.f32 %v839, %v735
        %v848 = vmul.f32 %v840, %v736
        %v849 = vmul.f32 %v841, %v737
        %v850 = vmul.f32 %v842, 1.442695
        %v851 = vpow.pop %v850
        %v852 = vmul.f32 %v843, 1.442695
        %v853 = vpow.pop %v852
        %v854 = vmul.f32 %v844, 1.442695
        %v855 = vpow.pop %v854
        %v856 = vmul.f32 %v845, 1.442695
        %v857 = vpow.pop %v856
        %v858 = vmul.f32 %v846, 1.442695
        %v859 = vpow.pop %v858
        %v860 = vmul.f32 %v847, 1.442695
        %v861 = vpow.pop %v860
        %v862 = vmul.f32 %v848, 1.442695
        %v863 = vpow.pop %v862
        %v864 = vmul.f32 %v849, 1.442695
        %v865 = vpow.pop %v864
        %v866 = vmul.f32 %v826, %v851
        %v867 = vmul.f32 %v827, %v853
        %v868 = vmul.f32 %v828, %v855
        %v869 = vmul.f32 %v829, %v857
        %v870 = vmul.f32 %v830, %v859
        %v871 = vmul.f32 %v831, %v861
        %v872 = vmul.f32 %v832, %v863
        %v873 = vmul.f32 %v833, %v865
        %v874 = vsub.f32 1.0, %v866
        %v875 = vsub.f32 1.0, %v867
        %v876 = vsub.f32 1.0, %v868
        %v877 = vsub.f32 1.0, %v869
        %v878 = vsub.f32 1.0, %v870
        %v879 = vsub.f32 1.0, %v871
        %v880 = vsub.f32 1.0, %v872
        %v881 = vsub.f32 1.0, %v873
        %v882 = vmul.f32 %v722, %v874
        %v883 = vmul.f32 %v723, %v875
        %v884 = vmul.f32 %v724, %v876
        %v885 = vmul.f32 %v725, %v877
        %v886 = vmul.f32 %v726, %v878
        %v887 = vmul.f32 %v727, %v879
        %v888 = vmul.f32 %v728, %v880
        %v889 = vmul.f32 %v729, %v881
        %v890 = vmul.f32 %v688, 0.5
        %v891 = vmul.f32 %v690, 0.5
        %v892 = vmul.f32 %v692, 0.5
        %v893 = vmul.f32 %v694, 0.5
        %v894 = vmul.f32 %v698, 0.5
        %v895 = vmul.f32 %v700, 0.5
        %v896 = vmul.f32 %v702, 0.5
        %v897 = vmul.f32 %v704, 0.5
        %v898 = vadd.f32 %v882, 1.0
        %v899 = vadd.f32 %v883, 1.0
        %v900 = vadd.f32 %v884, 1.0
        %v901 = vadd.f32 %v885, 1.0
        %v902 = vadd.f32 %v886, 1.0
        %v903 = vadd.f32 %v887, 1.0
        %v904 = vadd.f32 %v888, 1.0
        %v905 = vadd.f32 %v889, 1.0
        %v906 = vmul.f32 %v890, %v898
        %v907 = vmul.f32 %v891, %v899
        %v908 = vmul.f32 %v892, %v900
        %v909 = vmul.f32 %v893, %v901
        %v910 = vmul.f32 %v894, %v902
        %v911 = vmul.f32 %v895, %v903
        %v912 = vmul.f32 %v896, %v904
        %v913 = vmul.f32 %v897, %v905
        %v914 = vld [vmem:[%s6] sm:$0x3]
        %v915 = vpack.c.bf16 %v908, %v906
        %v916 = vpack.c.bf16 %v909, %v907
        %v917 = vpack.c.bf16 %v912, %v910
        %v918 = vpack.c.bf16 %v913, %v911
        %v919 = vld [vmem:[%s7] sm:$0xf]
        %921 = vset.pattern.permute.xlu0 0
        %922 = vperm.xlu0 %921, %v919
        %v923 = vpop.permute.xlu0 %922
        %vm925 = vcmask 261120
        %v927 = vsel %vm925, %v914, 0
        %929 = vmatprep.subr.bf16.mxu0 %v916
        %930 = vmatpush1.bf16.msra.mxu0 %v915
        %931 = vmatprep.subr.bf16.mxu0 %v918
        %932 = vmatpush1.bf16.msra.mxu0 %v917
        %933 = vmatprep.subr.bf16.mxu0 0
        %934 = vmatpush1.bf16.msra.mxu0 0
        %935 = vmatprep.subr.bf16.mxu0 0
        %936 = vmatpush1.bf16.msra.mxu0 0
        %937 = vmatprep.subr.bf16.mxu0 0
        %938 = vmatpush1.bf16.msra.mxu0 0
        %939 = vmatprep.subr.bf16.mxu0 0
        %940 = vmatpush1.bf16.msra.mxu0 0
        %941 = vmatprep.subr.bf16.mxu0 0
        %942 = vmatpush1.bf16.msra.mxu0 0
        %943 = vmatprep.subr.bf16.mxu0 0
        %944 = vmatpush1.bf16.msra.mxu0 0
        %945 = vmatprep.subr.bf16.mxu0 0
        %946 = vmatpush1.bf16.msra.mxu0 0
        %947 = vmatprep.subr.bf16.mxu0 0
        %948 = vmatpush1.bf16.msra.mxu0 0
        %949 = vmatprep.subr.bf16.mxu0 0
        %950 = vmatpush1.bf16.msra.mxu0 0
        %951 = vmatprep.subr.bf16.mxu0 0
        %952 = vmatpush1.bf16.msra.mxu0 0
        %953 = vmatprep.subr.bf16.mxu0 0
        %954 = vmatpush1.bf16.msra.mxu0 0
        %955 = vmatprep.subr.bf16.mxu0 0
        %956 = vmatpush1.bf16.msra.mxu0 0
        %957 = vmatprep.subr.bf16.mxu0 0
        %958 = vmatpush1.bf16.msra.mxu0 0
        %959 = vmatprep.subr.bf16.mxu0 0
        %960 = vmatpush1.bf16.msra.mxu0 0
        %961 = vmatprep.mubr.bf16.mxu0 0
        %962 = vmatmul.mubr.bf16.gmra.mrb[0].mxu0 %v927
        %v963 = vpop.f32.mrb[0].mxu0
        %v964 = vadd.f32 %v923, %v963
        %v965 = vpop.f32.mrb[0].mxu0
        %v966 = vadd.f32 %v923, %v965
        %v967 = vpop.f32.mrb[0].mxu0
        %v968 = vpop.f32.mrb[0].mxu0
        %969 = vdwg.mxu0
        %v972 = vcombine.low %v964, %v966
        %v974 = vadd.f32 %v595, %v972
        %975 = vst [vmem:[%s312] sm:$0xff] %v974
        %s976 = sand.u32 %s217, 1
        %s977 = scalar_lea.sflag [#allocation4], %s976
        %s978 = sand.u32 %s217, 1
        %s979 = smul.addr %s978, 8
        %s980 = scalar_lea.vmem [#allocation3], %s979
        // Predicated region
        $region57: #{tpu_custom_call.1} parent=51 // pred_check
          %p981 = pneg %p227
        $region58: #{tpu_custom_call.1} parent=51 // pred_check_branch
          %983 = sbr.rel (%p981) target = $region60
        $region59: #{tpu_custom_call.1} parent=51 // pred_region
          %s984 = smul.u32 2, %s27
          %s986 = ssub.s32 128, 128
          %987 = vsyncadd %s977, %s986
          %s988 = smul.addr %s26, 2
          %s989 = sadd.s32 %s984, %s988
          %s990 = smul.addr %s989, 64
          %s991 = scalar_lea.hbm %s8, %s990
          %s993 = sshll.u32 %s980, 4
          %s994 = int_to_ptr.vmem [resolvable:$true] %s993
          %996 = dma.vmem_to_hbm [thread:$0]  %s994, 128, %s991, %s977
        $region60: #{tpu_custom_call.1} parent=51 // pred_fallthru
          _
      $region52: #{tpu_custom_call.1} parent=5 // pred_fallthru
        _
      %p997 = scmp.le.s32.totalorder 2, %s17
      // Predicated region
      $region61: #{tpu_custom_call.1} parent=5 // pred_check
        %p998 = pneg %p997
      $region62: #{tpu_custom_call.1} parent=5 // pred_check_branch
        %1000 = sbr.rel (%p998) target = $region64
      $region63: #{tpu_custom_call.1} parent=5 // pred_region
        %s1001 = ssub.s32 %s17, 2
        // Predicated region
        $region65: #{tpu_custom_call.1} parent=63 // pred_check
          %p1002 = pneg %p233
        $region66: #{tpu_custom_call.1} parent=63 // pred_check_branch
          %1004 = sbr.rel (%p1002) target = $region68
        $region67: #{tpu_custom_call.1} parent=63 // pred_region
          %s1005 = sand.u32 %s218, 1
          %s1006 = scalar_lea.sflag [#allocation4], %s1005
          %s1007 = sand.u32 %s218, 1
          %s1008 = smul.addr %s1007, 8
          %s1009 = scalar_lea.vmem [#allocation3], %s1008
          %1010 = dma.done %s1006, 128
        $region68: #{tpu_custom_call.1} parent=63 // pred_fallthru
          _
      $region64: #{tpu_custom_call.1} parent=5 // pred_fallthru
        _
    $region6: #{tpu_custom_call.1} parent=1 // loop_footer
      %s21 = sadd.s32 1, %s17
    $region7: #{tpu_custom_call.1} parent=1 // loop_footer_branch
      %16 = sbr.rel target = $region3
    $region8: #{tpu_custom_call.1} parent=1 // loop_exit
      _
    %1011 = vsyncpa [#allocation4], 1
    %s1012 = scalar_lea.sflag [#allocation4], 1
    %1013 = vsyncpa %s1012, 1

</llo_original>
